<compile_context>
chip_gen: v7x
topology: tpu7x:2x2x1
jax: 0.10.0
libtpu: 0.0.40
codegen_flags: <defaults>
</compile_context>

<pallas_src>
import jax
import jax.numpy as jnp
from jax import lax
from jax.experimental import pallas as pl
from jax.experimental.pallas import tpu as pltpu


# ------------------------------ helpers --------------------------------------
def _round_up(n, m):
    return ((n + m - 1) // m) * m


def _pick_tiles(E, N, D, itemsize):
    """Pick (tile_e, tile_n) tiles that are lane/sublane friendly and fit VMEM."""
    if E <= 256:
        tile_e = E              # block == full dim is always legal
    elif E % 256 == 0:
        tile_e = 256
    elif E % 128 == 0:
        tile_e = 128
    else:
        tile_e = E

    tile_n = 512
    while tile_n > 128 and tile_n > _round_up(N, 128):
        tile_n //= 2

    # Double-buffered per-block footprint must stay under the 32 MiB scoped
    # VMEM limit we request below (works on v5e / v6e / v7x).
    budget = 20 << 20

    def footprint(tn):
        return 2 * (tile_e * D * itemsize + tn * D * itemsize
                    + tile_e * tn * 4)  # output is f32

    while tile_n > 128 and footprint(tile_n) > budget:
        tile_n //= 2
    return tile_e, tile_n


# ---------------------------- Pallas kernel -----------------------------------
def _matmul_act_kernel(alpha_ref, w_ref, x_ref, o_ref):
    """o = prelu(W @ X^T, alpha); alpha=0 gives ReLU.

    alpha_ref: (1,) f32 in SMEM (runtime scalar, no recompile on change)
    w_ref:     (tile_e, D)      weight tile (resident across the N-tile axis)
    x_ref:     (tile_n, D)      node-feature tile, row-major (no HBM transpose)
    o_ref:     (tile_e, tile_n) lane-dense output tile
    """
    acc = lax.dot_general(
        w_ref[...], x_ref[...],
        dimension_numbers=(((1,), (1,)), ((), ())),   # contract on D (trans-B)
        preferred_element_type=jnp.float32)
    a = alpha_ref[0]
    o_ref[...] = jnp.where(acc >= 0.0, acc, a * acc).astype(o_ref.dtype)


def fused_matmul_act(w_stack, f_stack, alpha, *, tile_e, tile_n):
    """act(W_g @ F_g^T) for all groups g in one pallas_call.

    w_stack: (G, E, D)
    f_stack: (G, M, D)   M is a multiple of tile_n (padded by caller)
    returns: (G, E, M) float32
    """
    G, E, D = w_stack.shape
    G2, M, D2 = f_stack.shape
    assert G == G2 and D == D2
    assert E % tile_e == 0 and M % tile_n == 0

    grid = (G, E // tile_e, M // tile_n)
    w_spec = pl.BlockSpec((None, tile_e, D), lambda g, i, j: (g, i, 0))
    x_spec = pl.BlockSpec((None, tile_n, D), lambda g, i, j: (g, j, 0))
    o_spec = pl.BlockSpec((None, tile_e, tile_n), lambda g, i, j: (g, i, j))
    smem_spec = pl.BlockSpec(memory_space=pltpu.MemorySpace.SMEM)

    alpha_arr = jnp.asarray(alpha, jnp.float32).reshape((1,))

    return pl.pallas_call(
        _matmul_act_kernel,
        out_shape=jax.ShapeDtypeStruct((G, E, M), jnp.float32),
        grid_spec=pl.GridSpec(grid=grid,
                              in_specs=[smem_spec, w_spec, x_spec],
                              out_specs=o_spec),
        compiler_params=pltpu.CompilerParams(
            dimension_semantics=("parallel", "parallel", "parallel"),
            vmem_limit_bytes=32 << 20),
    )(alpha_arr, w_stack, f_stack)


# ----------------------------- Encoder wrapper --------------------------------
def xavier_uniform(key, shape):
    fan_out, fan_in = shape  # torch FloatTensor(embed_dim, dim)
    bound = jnp.sqrt(6.0 / (fan_in + fan_out))
    return jax.random.uniform(key, shape, jnp.float32, -bound, bound)


def encoder_forward(params, neigh_feats, shuf_neigh_feats,
                    skip_feats=None, shuf_skip_feats=None,
                    *, skip_connection=False, activation=None, alpha=0.25,
                    compute_dtype=jnp.float32):
    """Mirrors Encoder.forward (gcn / non-gcn both use neigh_feats directly).

    Returns (combined1, combined2) with torch layout (embed_dim[, x2], N).
    """
    w = params["weight"].astype(compute_dtype)
    E, D = w.shape
    N = neigh_feats.shape[0]

    itemsize = jnp.dtype(compute_dtype).itemsize
    tile_e, tile_n = _pick_tiles(E, N, D, itemsize)
    n_pad = _round_up(max(N, 1), tile_n)

    def prep(x):
        x = x.astype(compute_dtype)
        return jnp.pad(x, ((0, n_pad - N), (0, 0)))

    if not skip_connection:
        w_stack = w[None]                                               # (1, E, D)
        f_stack = jnp.concatenate(
            [prep(neigh_feats), prep(shuf_neigh_feats)], axis=0)[None]  # (1, 2*n_pad, D)
    else:
        w_skip = params["weight_skip"].astype(compute_dtype)
        w_stack = jnp.stack([w_skip, w], axis=0)                        # (2, E, D)
        f_stack = jnp.stack(
            [jnp.concatenate([prep(skip_feats), prep(shuf_skip_feats)], axis=0),
             jnp.concatenate([prep(neigh_feats), prep(shuf_neigh_feats)], axis=0)],
            axis=0)                                                     # (2, 2*n_pad, D)

    a = alpha if activation == "prelu" else 0.0    # default activation -> ReLU
    out = fused_matmul_act(w_stack, f_stack, a,
                           tile_e=tile_e, tile_n=tile_n)                # (G, E, 2*n_pad)

    if not skip_connection:
        c1 = out[0, :, :N]
        c2 = out[0, :, n_pad:n_pad + N]
    else:
        # act is elementwise, so act(cat([skip_mm, mp_mm], 0)) splits cleanly.
        c1 = jnp.concatenate([out[0, :, :N], out[1, :, :N]], axis=0)
        c2 = jnp.concatenate([out[0, :, n_pad:n_pad + N],
                              out[1, :, n_pad:n_pad + N]], axis=0)
    return c1, c2


# ----------------------------------- main --------------------------------------
if __name__ == "__main__":
    key = jax.random.PRNGKey(0)

    # Module hyperparameters (small, consistent with __init__):
    feat_dim = 16
    embed_dim = 32
    gcn = False                     # default -> dim = 2 * feat_dim
    dim = feat_dim if gcn else 2 * feat_dim
    num_nodes = 8                   # batch of nodes

    k_w, k_ws, k1, k2, k3, k4 = jax.random.split(key, 6)
    params = {
        "weight": xavier_uniform(k_w, (embed_dim, dim)),
        "weight_skip": xavier_uniform(k_ws, (embed_dim, dim)),
    }

    # Synthetic aggregator outputs (what aggregator.forward would return).
    neigh_feats = jax.random.normal(k1, (num_nodes, dim), jnp.float32)
    shuf_neigh_feats = jax.random.normal(k2, (num_nodes, dim), jnp.float32)
    skip_feats = jax.random.normal(k3, (num_nodes, dim), jnp.float32)
    shuf_skip_feats = jax.random.normal(k4, (num_nodes, dim), jnp.float32)

    # ---- Path 1: default activation (ReLU), no skip connection ---------------
    c1, c2 = encoder_forward(params, neigh_feats, shuf_neigh_feats)
    jax.block_until_ready((c1, c2))

    ref1 = jnp.maximum(params["weight"] @ neigh_feats.T, 0.0)
    ref2 = jnp.maximum(params["weight"] @ shuf_neigh_feats.T, 0.0)
    assert c1.shape == (embed_dim, num_nodes) and c2.shape == (embed_dim, num_nodes)
    assert jnp.allclose(c1, ref1, rtol=1e-4, atol=1e-4)
    assert jnp.allclose(c2, ref2, rtol=1e-4, atol=1e-4)

    # ---- Path 2: PReLU activation + skip connection ---------------------------
    alpha = 0.25
    c1s, c2s = encoder_forward(params, neigh_feats, shuf_neigh_feats,
                               skip_feats, shuf_skip_feats,
                               skip_connection=True, activation="prelu",
                               alpha=alpha)
    jax.block_until_ready((c1s, c2s))

    def prelu(x):
        return jnp.where(x >= 0.0, x, alpha * x)

    r1 = prelu(jnp.concatenate([params["weight_skip"] @ skip_feats.T,
                                params["weight"] @ neigh_feats.T], axis=0))
    r2 = prelu(jnp.concatenate([params["weight_skip"] @ shuf_skip_feats.T,
                                params["weight"] @ shuf_neigh_feats.T], axis=0))
    assert c1s.shape == (2 * embed_dim, num_nodes)
    assert c2s.shape == (2 * embed_dim, num_nodes)
    assert jnp.allclose(c1s, r1, rtol=1e-4, atol=1e-4)
    assert jnp.allclose(c2s, r2, rtol=1e-4, atol=1e-4)

    print("KERNEL_OK")
</pallas_src>

<mosaic_0001>
module attributes {stable_mosaic.version = 11 : i64} {
  func.func @_matmul_act_kernel(%arg0: i32, %arg1: i32, %arg2: i32, %arg3: memref<1xf32, #tpu.memory_space<smem>>, %arg4: memref<1x32x32xf32, #tpu.memory_space<vmem>>, %arg5: memref<1x128x32xf32, #tpu.memory_space<vmem>>, %arg6: memref<1x32x128xf32, #tpu.memory_space<vmem>>) attributes {dimension_semantics = [#tpu.dimension_semantics<parallel>, #tpu.dimension_semantics<parallel>, #tpu.dimension_semantics<parallel>], iteration_bounds = array<i64: 1, 1, 2>, scalar_prefetch = 0 : i64, scratch_operands = 0 : i64, tpu.core_type = #tpu.core_type<tc>, window_params = [{transform_indices = @transform_0, window_bounds = array<i64: 1>}, {transform_indices = @transform_1, window_bounds = array<i64: 1, 32, 32>}, {transform_indices = @transform_2, window_bounds = array<i64: 1, 128, 32>}, {transform_indices = @transform_3, window_bounds = array<i64: 1, 32, 128>}]} {
    %c0 = arith.constant 0 : index
    %c0_0 = arith.constant 0 : index
    %c0_1 = arith.constant 0 : index
    %0 = vector.load %arg4[%c0, %c0_0, %c0_1] : memref<1x32x32xf32, #tpu.memory_space<vmem>>, vector<1x32x32xf32>
    %1 = vector.shape_cast %0 : vector<1x32x32xf32> to vector<32x32xf32>
    %c0_2 = arith.constant 0 : index
    %c0_3 = arith.constant 0 : index
    %c0_4 = arith.constant 0 : index
    %2 = vector.load %arg5[%c0_2, %c0_3, %c0_4] : memref<1x128x32xf32, #tpu.memory_space<vmem>>, vector<1x128x32xf32>
    %3 = vector.shape_cast %2 : vector<1x128x32xf32> to vector<128x32xf32>
    %cst = arith.constant dense<0.000000e+00> : vector<32x128xf32>
    %4 = tpu.matmul %1, %3, %cst {dimension_numbers = #tpu.dot_dimension_numbers<[1], [1], [0], [0], [0, 0, 1, 0], [], []>} : vector<32x32xf32>, vector<128x32xf32>, vector<32x128xf32> -> vector<32x128xf32>
    %c0_5 = arith.constant 0 : index
    %5 = memref.load %arg3[%c0_5] : memref<1xf32, #tpu.memory_space<smem>>
    %cst_6 = arith.constant 0.000000e+00 : f32
    %6 = vector.broadcast %cst_6 : f32 to vector<32x128xf32>
    %7 = arith.cmpf oge, %4, %6 : vector<32x128xf32>
    %8 = vector.broadcast %5 : f32 to vector<32x128xf32>
    %9 = arith.mulf %8, %4 : vector<32x128xf32>
    %10 = arith.select %7, %4, %9 : vector<32x128xi1>, vector<32x128xf32>
    %c0_7 = arith.constant 0 : index
    %c0_8 = arith.constant 0 : index
    %c0_9 = arith.constant 0 : index
    %11 = vector.load %arg6[%c0_7, %c0_8, %c0_9] : memref<1x32x128xf32, #tpu.memory_space<vmem>>, vector<1x32x128xf32>
    %12 = vector.shape_cast %11 : vector<1x32x128xf32> to vector<32x128xf32>
    %13 = vector.shape_cast %10 : vector<32x128xf32> to vector<1x32x128xf32>
    tpu.vector_store %arg6[%c0_7, %c0_8, %c0_9], %13 {strides = array<i32>} : memref<1x32x128xf32, #tpu.memory_space<vmem>>, vector<1x32x128xf32>,
    return
  }
  func.func @transform_0(%arg0: i32, %arg1: i32, %arg2: i32) -> i32 {
    %c0_i32 = arith.constant 0 : i32
    %c0_i32_0 = arith.constant 0 : i32
    return %c0_i32 : i32
  }
  func.func @transform_1(%arg0: i32, %arg1: i32, %arg2: i32) -> (i32, i32, i32) {
    %c0_i32 = arith.constant 0 : i32
    %c0_i32_0 = arith.constant 0 : i32
    return %arg0, %arg1, %c0_i32 : i32, i32, i32
  }
  func.func @transform_2(%arg0: i32, %arg1: i32, %arg2: i32) -> (i32, i32, i32) {
    %c0_i32 = arith.constant 0 : i32
    %c0_i32_0 = arith.constant 0 : i32
    return %arg0, %arg2, %c0_i32 : i32, i32, i32
  }
  func.func @transform_3(%arg0: i32, %arg1: i32, %arg2: i32) -> (i32, i32, i32) {
    %c0_i32 = arith.constant 0 : i32
    return %arg0, %arg1, %arg2 : i32, i32, i32
  }
}

</mosaic_0001>

<llo_original>
// kernel: tpu_custom_call.1
$region0: #{tpu_custom_call.1}
  #allocation0 [shape = 'u32[]', space=smem, size = 0x4, offset = 0x4, fixed_abs, tag = 'smem constant byte address 0x4 - core index']
  #allocation1 [shape = 'u32[144,128]{1,0:T(1,128)}', space=vmem, size = 0x12000, scoped, tag = 'internal scratch']
  #allocation2 [shape = 'f32[1]{0:T(128)S(6)}', space=smem, size = 0x200, scoped, tag = 'scoped memory for tpu_custom_call.1']
  %s0 = inlined_call_operand.<no memory space> [shape: f32[1], index: 0, kind: input, shape index: {}]
  %s1 = inlined_call_operand.vmem [shape: f32[1,32,32], index: 1, kind: input, shape index: {}]
  %s2 = inlined_call_operand.vmem [shape: f32[1,256,32], index: 2, kind: input, shape index: {}]
  %s3 = inlined_call_operand.hbm [shape: f32[1,32,256], index: 3, kind: output, shape index: {}]
  %s4 = sld [smem:[#allocation0]]
  $region45: #{tpu_custom_call.1} parent=0
    _
  %s6 = ssub.s32 1, %s4
  %s7 = scalar_select 0, %s6, %s4
  %8 = sst [smem:[#allocation2]] %s0
  $region1: #{tpu_custom_call.1} parent=0
    #allocation3 [shape = 'u8[32768]{0}', space=vmem, size = 0x8000, scoped, tag = 'output window, operand 0']
    #allocation4 [shape = 's32[2]{0}', space=sflag, size = 0x8, scoped, tag = 'scoped memory for tpu_custom_call.1']
    %9 = vsyncpa [#allocation4], 0
    %s10 = scalar_lea.sflag [#allocation4], 1
    %11 = vsyncpa %s10, 0
    loop: start=0, step=1, limit=4
    $region2: #{tpu_custom_call.1} parent=1 // loop_pre_header
      _
    $region3: #{tpu_custom_call.1} parent=1 // loop_header
      %s13 = sphi 0, %s17
      %p14 = scmp.ge.s32.totalorder %s13, 4
      %s20 = sphi 0, %s39
      %s21 = sphi 0, %s35
      %s22 = sphi 0, %s31
      %s23 = sphi 0, %s20
      %s24 = sphi 0, %s21
      %s25 = sphi 0, %s22
      %s26 = sphi 0, %s23
      %s27 = sphi 0, %s24
      %s28 = sphi 0, %s25
      %s40 = sphi 0, %s40
      %s42 = sphi 0, %s40
      %s43 = sphi 0, %s42
      %s57 = sphi 0, %s43
      %s65 = sphi 0, %s67
      %s68 = sphi 0, %s65
      %s69 = sphi 0, %s68
      %s85 = sphi 0, %s69
      %s93 = sphi 0, %s95
      %s96 = sphi 0, %s93
      %s97 = sphi 0, %s96
      %s113 = sphi 0, %s97
      %s123 = sphi 0, %s125
      %s126 = sphi 0, %s123
      %s127 = sphi 0, %s126
      %s143 = sphi 0, %s127
    $region4: #{tpu_custom_call.1} parent=1 // loop_header_branch
      %16 = sbr.rel (%p14) target = $region8
    $region5: #{tpu_custom_call.1} parent=1 // loop_body
      %s18 = ssub.s32 %s13, 1
      %s19 = ssub.s32 %s13, 2
      %s29 = sadd.s32 1, %s22
      %p30 = scmp.ge.s32.totalorder %s29, 2
      %s31 = scalar_select %p30, 0, %s29
      %s32 = sadd.s32 1, %s21
      %s33 = scalar_select %p30, %s32, %s21
      %p34 = scmp.ge.s32.totalorder %s33, 1
      %s35 = scalar_select %p34, 0, %s33
      %s36 = sadd.s32 1, %s20
      %s37 = scalar_select %p34, %s36, %s20
      %p38 = scmp.ge.s32.totalorder %s37, 1
      %s39 = scalar_select %p38, 0, %s37
      %s41 = sadd.s32 %s40, 1
      %p44 = scmp.eq.s32.totalorder %s13, 1
      %p45 = scmp.ne.s32.totalorder %s40, %s42
      %p46 = scmp.eq.s32.totalorder %s13, 0
      %p47 = por %p45, %p46
      %p48 = scmp.ne.s32.totalorder %s40, %s42
      %p49 = scmp.eq.s32.totalorder %s18, 1
      %p50 = por %p48, %p49
      %p51 = scmp.ne.s32.totalorder %s42, %s43
      %p52 = scmp.eq.s32.totalorder %s18, 0
      %p53 = por %p51, %p52
      %p54 = scmp.ne.s32.totalorder %s42, %s43
      %p55 = scmp.eq.s32.totalorder %s19, 1
      %p56 = por %p54, %p55
      %p58 = scmp.ne.s32.totalorder %s43, %s57
      %p59 = scmp.eq.s32.totalorder %s19, 0
      %p60 = por %p58, %p59
      %s61 = ssub.s32 %s20, %s39
      %s62 = ssub.s32 %s21, %s35
      %s63 = sor.u32 %s61, %s62
      %p64 = scmp.eq.s32.totalorder %s63, 0
      %s66 = sadd.s32 %s65, 1
      %s67 = scalar_select %p64, %s65, %s66
      %p70 = pneg %p64
      %p71 = scmp.eq.s32.totalorder %s13, 1
      %p72 = por %p70, %p71
      %p73 = scmp.ne.s32.totalorder %s65, %s68
      %p74 = scmp.eq.s32.totalorder %s13, 0
      %p75 = por %p73, %p74
      %p76 = scmp.ne.s32.totalorder %s65, %s68
      %p77 = scmp.eq.s32.totalorder %s18, 1
      %p78 = por %p76, %p77
      %p79 = scmp.ne.s32.totalorder %s68, %s69
      %p80 = scmp.eq.s32.totalorder %s18, 0
      %p81 = por %p79, %p80
      %p82 = scmp.ne.s32.totalorder %s68, %s69
      %p83 = scmp.eq.s32.totalorder %s19, 1
      %p84 = por %p82, %p83
      %p86 = scmp.ne.s32.totalorder %s69, %s85
      %p87 = scmp.eq.s32.totalorder %s19, 0
      %p88 = por %p86, %p87
      %s89 = ssub.s32 %s20, %s39
      %s90 = ssub.s32 %s22, %s31
      %s91 = sor.u32 %s89, %s90
      %p92 = scmp.eq.s32.totalorder %s91, 0
      %s94 = sadd.s32 %s93, 1
      %s95 = scalar_select %p92, %s93, %s94
      %p98 = pneg %p92
      %p99 = scmp.eq.s32.totalorder %s13, 1
      %p100 = por %p98, %p99
      %p101 = scmp.ne.s32.totalorder %s93, %s96
      %p102 = scmp.eq.s32.totalorder %s13, 0
      %p103 = por %p101, %p102
      %p104 = scmp.ne.s32.totalorder %s93, %s96
      %p105 = scmp.eq.s32.totalorder %s18, 1
      %p106 = por %p104, %p105
      %p107 = scmp.ne.s32.totalorder %s96, %s97
      %p108 = scmp.eq.s32.totalorder %s18, 0
      %p109 = por %p107, %p108
      %p110 = scmp.ne.s32.totalorder %s96, %s97
      %p111 = scmp.eq.s32.totalorder %s19, 1
      %p112 = por %p110, %p111
      %p114 = scmp.ne.s32.totalorder %s97, %s113
      %p115 = scmp.eq.s32.totalorder %s19, 0
      %p116 = por %p114, %p115
      %s117 = ssub.s32 %s20, %s39
      %s118 = ssub.s32 %s21, %s35
      %s119 = sor.u32 %s117, %s118
      %s120 = ssub.s32 %s22, %s31
      %s121 = sor.u32 %s119, %s120
      %p122 = scmp.eq.s32.totalorder %s121, 0
      %s124 = sadd.s32 %s123, 1
      %s125 = scalar_select %p122, %s123, %s124
      %p128 = pneg %p122
      %p129 = scmp.eq.s32.totalorder %s13, 1
      %p130 = por %p128, %p129
      %p131 = scmp.ne.s32.totalorder %s123, %s126
      %p132 = scmp.eq.s32.totalorder %s13, 0
      %p133 = por %p131, %p132
      %p134 = scmp.ne.s32.totalorder %s123, %s126
      %p135 = scmp.eq.s32.totalorder %s18, 1
      %p136 = por %p134, %p135
      %p137 = scmp.ne.s32.totalorder %s126, %s127
      %p138 = scmp.eq.s32.totalorder %s18, 0
      %p139 = por %p137, %p138
      %p140 = scmp.ne.s32.totalorder %s126, %s127
      %p141 = scmp.eq.s32.totalorder %s19, 1
      %p142 = por %p140, %p141
      %p144 = scmp.ne.s32.totalorder %s127, %s143
      %p145 = scmp.eq.s32.totalorder %s19, 0
      %p146 = por %p144, %p145
      %p147 = scmp.le.s32.totalorder 1, %s13
      %p148 = scmp.lt.s32.totalorder %s13, 3
      %p149 = pnand %p147, %p148
      %p150 = pneg %p149
      // Predicated region
      $region9: #{tpu_custom_call.1} parent=5 // pred_check
        _
      $region10: #{tpu_custom_call.1} parent=5 // pred_check_branch
        %152 = sbr.rel (%p149) target = $region12
      $region11: #{tpu_custom_call.1} parent=5 // pred_region
        %s153 = ssub.s32 %s13, 1
        // Predicated region
        $region13: #{tpu_custom_call.1} parent=11 // pred_check
          %p154 = pneg %p53
        $region14: #{tpu_custom_call.1} parent=11 // pred_check_branch
          %156 = sbr.rel (%p154) target = $region16
        $region15: #{tpu_custom_call.1} parent=11 // pred_region
          _
        $region16: #{tpu_custom_call.1} parent=11 // pred_fallthru
          _
        // Predicated region
        $region17: #{tpu_custom_call.1} parent=11 // pred_check
          %p157 = pneg %p81
        $region18: #{tpu_custom_call.1} parent=11 // pred_check_branch
          %159 = sbr.rel (%p157) target = $region20
        $region19: #{tpu_custom_call.1} parent=11 // pred_region
          %s160 = smul.u32 4, %s24
          %p161 = scmp.lt.s32.totalorder %s23, 0
          %s162 = scalar_select %p161, %s23, 0
          %p163 = scmp.lt.s32.totalorder %s160, 3
          %s164 = scalar_select %p163, %s160, 3
          %s165 = smul.addr %s162, 4
          %s166 = sadd.s32 %s164, %s165
          %s167 = smul.addr %s166, 8
          %s168 = scalar_lea.vmem %s1, %s167
          %s169 = smul.u32 4, %s24
        $region20: #{tpu_custom_call.1} parent=11 // pred_fallthru
          _
      $region12: #{tpu_custom_call.1} parent=5 // pred_fallthru
        _
      %p170 = scmp.lt.s32.totalorder %s13, 2
      // Predicated region
      $region21: #{tpu_custom_call.1} parent=5 // pred_check
        %p171 = pneg %p170
      $region22: #{tpu_custom_call.1} parent=5 // pred_check_branch
        %173 = sbr.rel (%p171) target = $region24
      $region23: #{tpu_custom_call.1} parent=5 // pred_region
        // Predicated region
        $region25: #{tpu_custom_call.1} parent=23 // pred_check
          %p174 = pneg %p103
        $region26: #{tpu_custom_call.1} parent=23 // pred_check_branch
          %176 = sbr.rel (%p174) target = $region28
        $region27: #{tpu_custom_call.1} parent=23 // pred_region
          %s177 = smul.u32 16, %s22
          %p178 = scmp.lt.s32.totalorder %s20, 0
          %s179 = scalar_select %p178, %s20, 0
          %p180 = scmp.lt.s32.totalorder %s177, 31
          %s181 = scalar_select %p180, %s177, 31
          %s182 = smul.addr %s179, 32
          %s183 = sadd.s32 %s181, %s182
          %s184 = smul.addr %s183, 8
          %s185 = scalar_lea.vmem %s2, %s184
          %s186 = smul.u32 16, %s22
        $region28: #{tpu_custom_call.1} parent=23 // pred_fallthru
          _
      $region24: #{tpu_custom_call.1} parent=5 // pred_fallthru
        _
      %p187 = scmp.le.s32.totalorder 1, %s13
      %p188 = scmp.lt.s32.totalorder %s13, 3
      %p189 = pnand %p187, %p188
      %p190 = pneg %p189
      // Predicated region
      $region29: #{tpu_custom_call.1} parent=5 // pred_check
        _
      $region30: #{tpu_custom_call.1} parent=5 // pred_check_branch
        %192 = sbr.rel (%p189) target = $region32
      $region31: #{tpu_custom_call.1} parent=5 // pred_region
        %s193 = ssub.s32 %s13, 1
        %p194 = pneg %p53
        %p195 = pneg %p50
        %s196 = smul.u32 4, %s24
        %p197 = scmp.lt.s32.totalorder %s23, 0
        %s198 = scalar_select %p197, %s23, 0
        %p199 = scmp.lt.s32.totalorder %s196, 3
        %s200 = scalar_select %p199, %s196, 3
        %s201 = smul.addr %s198, 4
        %s202 = sadd.s32 %s200, %s201
        %s203 = smul.addr %s202, 8
        %s204 = scalar_lea.vmem %s1, %s203
        %p205 = pneg %p81
        %p206 = pneg %p78
        %s207 = smul.u32 16, %s25
        %p208 = scmp.lt.s32.totalorder %s23, 0
        %s209 = scalar_select %p208, %s23, 0
        %p210 = scmp.lt.s32.totalorder %s207, 31
        %s211 = scalar_select %p210, %s207, 31
        %s212 = smul.addr %s209, 32
        %s213 = sadd.s32 %s211, %s212
        %s214 = smul.addr %s213, 8
        %s215 = scalar_lea.vmem %s2, %s214
        %p216 = pneg %p109
        %p217 = pneg %p106
        %p218 = pneg %p139
        %p219 = pneg %p136
        %s220 = sand.u32 %s126, 1
        %s221 = scalar_lea.sflag [#allocation4], %s220
        %s222 = sand.u32 %s126, 1
        %s223 = smul.addr %s222, 32
        %s224 = scalar_lea.vmem [#allocation3], %s223
        %s225 = smul.u32 4, %s24
        %p226 = scmp.lt.s32.totalorder %s23, 0
        %s227 = scalar_select %p226, %s23, 0
        %p228 = scmp.lt.s32.totalorder %s225, 3
        %s229 = scalar_select %p228, %s225, 3
        %s230 = smul.addr %s227, 4
        %s231 = sadd.s32 %s229, %s230
        %s232 = smul.addr %s231, 8
        %s233 = scalar_lea.vmem %s1, %s232
        %s234 = smul.u32 4, %s24
        %s235 = smul.u32 16, %s25
        %p236 = scmp.lt.s32.totalorder %s23, 0
        %s237 = scalar_select %p236, %s23, 0
        %p238 = scmp.lt.s32.totalorder %s235, 31
        %s239 = scalar_select %p238, %s235, 31
        %s240 = smul.addr %s237, 32
        %s241 = sadd.s32 %s239, %s240
        %s242 = smul.addr %s241, 8
        %s243 = scalar_lea.vmem %s2, %s242
        %s244 = smul.u32 16, %s25
        %s245 = smul.u32 4, %s24
        %v246 = vld [vmem:[%s233] sm:$0xff]
        %v247 = vld [vmem:[%s233 + $0x8] sm:$0xff]
        %v248 = vld [vmem:[%s233 + $0x10] sm:$0xff]
        %v249 = vld [vmem:[%s233 + $0x18] sm:$0xff]
        %v250 = vld [vmem:[%s243] sm:$0xff]
        %v251 = vld [vmem:[%s243 + $0x8] sm:$0xff]
        %v252 = vld [vmem:[%s243 + $0x10] sm:$0xff]
        %v253 = vld [vmem:[%s243 + $0x18] sm:$0xff]
        %v254 = vld [vmem:[%s243 + $0x20] sm:$0xff]
        %v255 = vld [vmem:[%s243 + $0x28] sm:$0xff]
        %v256 = vld [vmem:[%s243 + $0x30] sm:$0xff]
        %v257 = vld [vmem:[%s243 + $0x38] sm:$0xff]
        %v258 = vld [vmem:[%s243 + $0x40] sm:$0xff]
        %v259 = vld [vmem:[%s243 + $0x48] sm:$0xff]
        %v260 = vld [vmem:[%s243 + $0x50] sm:$0xff]
        %v261 = vld [vmem:[%s243 + $0x58] sm:$0xff]
        %v262 = vld [vmem:[%s243 + $0x60] sm:$0xff]
        %v263 = vld [vmem:[%s243 + $0x68] sm:$0xff]
        %v264 = vld [vmem:[%s243 + $0x70] sm:$0xff]
        %v265 = vld [vmem:[%s243 + $0x78] sm:$0xff]
        %vm266 = vcmask 261120
        %v268 = vsel %vm266, %v246, 0
        %v271 = vsel %vm266, %v247, 0
        %v274 = vsel %vm266, %v248, 0
        %v277 = vsel %vm266, %v249, 0
        %v280 = vsel %vm266, %v250, 0
        %v283 = vsel %vm266, %v251, 0
        %v286 = vsel %vm266, %v252, 0
        %v289 = vsel %vm266, %v253, 0
        %v292 = vsel %vm266, %v254, 0
        %v295 = vsel %vm266, %v255, 0
        %v298 = vsel %vm266, %v256, 0
        %v301 = vsel %vm266, %v257, 0
        %v304 = vsel %vm266, %v258, 0
        %v307 = vsel %vm266, %v259, 0
        %v310 = vsel %vm266, %v260, 0
        %v313 = vsel %vm266, %v261, 0
        %v316 = vsel %vm266, %v262, 0
        %v319 = vsel %vm266, %v263, 0
        %v322 = vsel %vm266, %v264, 0
        %v325 = vsel %vm266, %v265, 0
        %327 = vmatprep.subr.mxu0 0.0
        %328 = vmatpush1.xpose.msra.mxu0 %v280
        %329 = vmatprep.subr.mxu0 0.0
        %330 = vmatpush1.xpose.msra.mxu0 %v283
        %331 = vmatprep.subr.mxu0 0.0
        %332 = vmatpush1.xpose.msra.mxu0 %v286
        %333 = vmatprep.subr.mxu0 0.0
        %334 = vmatpush1.xpose.msra.mxu0 %v289
        %335 = vmatprep.subr.mxu0 0.0
        %336 = vmatpush1.xpose.msra.mxu0 %v292
        %337 = vmatprep.subr.mxu0 0.0
        %338 = vmatpush1.xpose.msra.mxu0 %v295
        %339 = vmatprep.subr.mxu0 0.0
        %340 = vmatpush1.xpose.msra.mxu0 %v298
        %341 = vmatprep.subr.mxu0 0.0
        %342 = vmatpush1.xpose.msra.mxu0 %v301
        %343 = vmatprep.subr.mxu0 0.0
        %344 = vmatpush1.xpose.msra.mxu0 %v304
        %345 = vmatprep.subr.mxu0 0.0
        %346 = vmatpush1.xpose.msra.mxu0 %v307
        %347 = vmatprep.subr.mxu0 0.0
        %348 = vmatpush1.xpose.msra.mxu0 %v310
        %349 = vmatprep.subr.mxu0 0.0
        %350 = vmatpush1.xpose.msra.mxu0 %v313
        %351 = vmatprep.subr.mxu0 0.0
        %352 = vmatpush1.xpose.msra.mxu0 %v316
        %353 = vmatprep.subr.mxu0 0.0
        %354 = vmatpush1.xpose.msra.mxu0 %v319
        %355 = vmatprep.subr.mxu0 0.0
        %356 = vmatpush1.xpose.msra.mxu0 %v322
        %357 = vmatprep.subr.mxu0 0.0
        %358 = vmatpush1.xpose.msra.mxu0 %v325
        %359 = vmatprep.subr.mxu0 0.0
        %360 = vmatpush1.xpose.msra.mxu0 0.0
        %361 = vmatprep.subr.mxu0 0.0
        %362 = vmatpush1.xpose.msra.mxu0 0.0
        %363 = vmatprep.subr.mxu0 0.0
        %364 = vmatpush1.xpose.msra.mxu0 0.0
        %365 = vmatprep.subr.mxu0 0.0
        %366 = vmatpush1.xpose.msra.mxu0 0.0
        %367 = vmatprep.subr.mxu0 0.0
        %368 = vmatpush1.xpose.msra.mxu0 0.0
        %369 = vmatprep.subr.mxu0 0.0
        %370 = vmatpush1.xpose.msra.mxu0 0.0
        %371 = vmatprep.subr.mxu0 0.0
        %372 = vmatpush1.xpose.msra.mxu0 0.0
        %373 = vmatprep.subr.mxu0 0.0
        %374 = vmatpush1.xpose.msra.mxu0 0.0
        %375 = vmatprep.subr.mxu0 0.0
        %376 = vmatpush1.xpose.msra.mxu0 0.0
        %377 = vmatprep.subr.mxu0 0.0
        %378 = vmatpush1.xpose.msra.mxu0 0.0
        %379 = vmatprep.subr.mxu0 0.0
        %380 = vmatpush1.xpose.msra.mxu0 0.0
        %381 = vmatprep.subr.mxu0 0.0
        %382 = vmatpush1.xpose.msra.mxu0 0.0
        %383 = vmatprep.subr.mxu0 0.0
        %384 = vmatpush1.xpose.msra.mxu0 0.0
        %385 = vmatprep.subr.mxu0 0.0
        %386 = vmatpush1.xpose.msra.mxu0 0.0
        %387 = vmatprep.subr.mxu0 0.0
        %388 = vmatpush1.xpose.msra.mxu0 0.0
        %389 = vmatprep.subr.mxu0 0.0
        %390 = vmatpush1.xpose.msra.mxu0 0.0
        %391 = vmatprep.mubr.f32.mxu0 0.0
        %392 = vmatmul.mubr.f32.gmra.mrb[0].mxu0 %v268
        %v393 = vpop.f32.mrb[0].mxu0
        %v394 = vadd.f32 0.0, %v393
        %v395 = vpop.f32.mrb[0].mxu0
        %396 = vmatprep.mubr.f32.mxu0 0.0
        %397 = vmatmul.mubr.f32.gmra.mrb[0].mxu0 %v271
        %v398 = vpop.f32.mrb[0].mxu0
        %v399 = vadd.f32 0.0, %v398
        %v400 = vpop.f32.mrb[0].mxu0
        %401 = vmatprep.mubr.f32.mxu0 0.0
        %402 = vmatmul.mubr.f32.gmra.mrb[0].mxu0 %v274
        %v403 = vpop.f32.mrb[0].mxu0
        %v404 = vadd.f32 0.0, %v403
        %v405 = vpop.f32.mrb[0].mxu0
        %406 = vmatprep.mubr.f32.mxu0 0.0
        %407 = vmatmul.mubr.f32.gmra.mrb[0].mxu0 %v277
        %v408 = vpop.f32.mrb[0].mxu0
        %v409 = vadd.f32 0.0, %v408
        %v410 = vpop.f32.mrb[0].mxu0
        %411 = vdwg.mxu0
        %s412 = sld [smem:[#allocation2]]
        %vm413 = vcmp.ge.f32.partialorder %v394, 0.0
        %vm414 = vcmp.ge.f32.partialorder %v399, 0.0
        %vm415 = vcmp.ge.f32.partialorder %v404, 0.0
        %vm416 = vcmp.ge.f32.partialorder %v409, 0.0
        %v417 = vstv %s412
        %v418 = vmul.f32 %v417, %v394
        %v419 = vmul.f32 %v417, %v399
        %v420 = vmul.f32 %v417, %v404
        %v421 = vmul.f32 %v417, %v409
        %v422 = vsel %vm413, %v394, %v418
        %v423 = vsel %vm414, %v399, %v419
        %v424 = vsel %vm415, %v404, %v420
        %v425 = vsel %vm416, %v409, %v421
        %426 = vst [vmem:[%s224] sm:$0xff] %v422
        %427 = vst [vmem:[%s224 + $0x8] sm:$0xff] %v423
        %428 = vst [vmem:[%s224 + $0x10] sm:$0xff] %v424
        %429 = vst [vmem:[%s224 + $0x18] sm:$0xff] %v425
        %s430 = sand.u32 %s126, 1
        %s431 = scalar_lea.sflag [#allocation4], %s430
        %s432 = sand.u32 %s126, 1
        %s433 = smul.addr %s432, 32
        %s434 = scalar_lea.vmem [#allocation3], %s433
        // Predicated region
        $region33: #{tpu_custom_call.1} parent=31 // pred_check
          %p435 = pneg %p136
        $region34: #{tpu_custom_call.1} parent=31 // pred_check_branch
          %437 = sbr.rel (%p435) target = $region36
        $region35: #{tpu_custom_call.1} parent=31 // pred_region
          %s438 = smul.u32 4, %s24
          %s440 = ssub.s32 512, 512
          %441 = vsyncadd %s431, %s440
          %s442 = smul.addr %s438, 2
          %s443 = sadd.s32 %s25, %s442
          %s444 = smul.addr %s23, 8
          %s445 = sadd.s32 %s443, %s444
          %s446 = smul.addr %s445, 128
          %s447 = scalar_lea.hbm %s3, %s446
          %s448 = sshll.u32 %s434, 4
          %s449 = int_to_ptr.vmem [resolvable:$true] %s448
          %454 = dma.vmem_to_hbm [thread:$0]  %s449, 512, %s447, %s431, 128, 256, 8
        $region36: #{tpu_custom_call.1} parent=31 // pred_fallthru
          _
      $region32: #{tpu_custom_call.1} parent=5 // pred_fallthru
        _
      %p455 = scmp.le.s32.totalorder 2, %s13
      // Predicated region
      $region37: #{tpu_custom_call.1} parent=5 // pred_check
        %p456 = pneg %p455
      $region38: #{tpu_custom_call.1} parent=5 // pred_check_branch
        %458 = sbr.rel (%p456) target = $region40
      $region39: #{tpu_custom_call.1} parent=5 // pred_region
        %s459 = ssub.s32 %s13, 2
        // Predicated region
        $region41: #{tpu_custom_call.1} parent=39 // pred_check
          %p460 = pneg %p142
        $region42: #{tpu_custom_call.1} parent=39 // pred_check_branch
          %462 = sbr.rel (%p460) target = $region44
        $region43: #{tpu_custom_call.1} parent=39 // pred_region
          %s463 = sand.u32 %s127, 1
          %s464 = scalar_lea.sflag [#allocation4], %s463
          %s465 = sand.u32 %s127, 1
          %s466 = smul.addr %s465, 32
          %s467 = scalar_lea.vmem [#allocation3], %s466
          %468 = dma.done %s464, 512
        $region44: #{tpu_custom_call.1} parent=39 // pred_fallthru
          _
      $region40: #{tpu_custom_call.1} parent=5 // pred_fallthru
        _
    $region6: #{tpu_custom_call.1} parent=1 // loop_footer
      %s17 = sadd.s32 1, %s13
    $region7: #{tpu_custom_call.1} parent=1 // loop_footer_branch
      %12 = sbr.rel target = $region3
    $region8: #{tpu_custom_call.1} parent=1 // loop_exit
      _
    %469 = vsyncpa [#allocation4], 1
    %s470 = scalar_lea.sflag [#allocation4], 1
    %471 = vsyncpa %s470, 1

</llo_original>
